<compile_context>
chip_gen: v6e
topology: v6e:2x2x1
jax: 0.10.0
libtpu: 0.0.40
codegen_flags: <defaults>
</compile_context>

<pallas_src>
import jax
import jax.numpy as jnp
from jax.experimental import pallas as pl
from jax.experimental.pallas import tpu as pltpu


def pooler_kernel(x_ref, w_ref, b_ref, o_ref):
    """One output-feature tile (single MXU pass, collapsed reduction).

    x_ref: [B, D]   first-token activations (grid-invariant, VMEM-resident)
    w_ref: [D, tn]  weight column tile, [in, out] layout (bf16)
    b_ref: [1, tn]  bias tile (f32)
    o_ref: [B, tn]  output tile
    """
    x = x_ref[...].astype(w_ref.dtype)            # tiny (B x D) cast in VMEM
    y = jnp.dot(x, w_ref[...], preferred_element_type=jnp.float32)
    o_ref[...] = jnp.maximum(y + b_ref[...], 0.0).astype(o_ref.dtype)


def _pick_tn(d: int, *, weight_itemsize: int,
             vmem_weight_budget: int = 16 * 1024 * 1024) -> int:
    """Output-feature tile width.

    Largest multiple of 128 dividing d such that the double-buffered weight
    column block (d * tn * itemsize * 2) stays under the budget, tn <= 2048,
    and (for d >= 256) tn <= d // 2 so a v7x megacore gets >= 2 parallel
    tiles.  Unaligned d falls back to a single full-dim block.
    """
    if d % 128 != 0:
        return d
    cap = min(2048, max(128, vmem_weight_budget // (2 * weight_itemsize * d)))
    if d >= 256:
        cap = min(cap, d // 2)
    cap = max(128, (cap // 128) * 128)
    t = min(cap, d)
    while t >= 128:
        if d % t == 0:
            return t
        t -= 128
    return 128


def prepare_pooler_params(weight, bias, *, param_dtype=jnp.bfloat16):
    """One-time parameter prep (init-time, NOT per forward call).

    weight: torch nn.Linear layout [out, in]  ->  [in, out], cast to bf16
            (so the kernel does a plain x @ W with no per-tile transpose).
    bias:   [out] -> f32 row vector [1, out].
    """
    weight_t = jnp.asarray(weight).T.astype(param_dtype)
    bias2d = jnp.asarray(bias).astype(jnp.float32).reshape(1, -1)
    return weight_t, bias2d


def pooler_forward(hidden_states, weight_t, bias2d, *, out_dtype=jnp.float32):
    """hidden_states: [B, S, D]; weight_t: [D, D] in [in, out] layout (bf16);
    bias2d: [1, D] f32.  Returns ReLU(hidden_states[:, 0] @ weight_t + bias)
    as [B, D]."""
    B, S, D = hidden_states.shape
    assert weight_t.shape == (D, D) and bias2d.shape == (1, D)

    if D % 128 == 0:
        # Fused first-token slice: the row-major reshape is free, and columns
        # [0, D) of every row of the [B, S*D] view are exactly
        # hidden_states[:, 0, :] — the x BlockSpec DMAs only those bytes.
        x2d = hidden_states.reshape(B, S * D)
    else:
        # Unaligned toy D: JAX-side slice, full-dim blocks keep (8,128) happy.
        x2d = hidden_states[:, 0]

    tn = _pick_tn(D, weight_itemsize=weight_t.dtype.itemsize)
    grid = (D // tn,)

    w_bytes = weight_t.size * weight_t.dtype.itemsize
    x_bytes = B * D * hidden_states.dtype.itemsize      # fetched once
    o_bytes = B * D * jnp.dtype(out_dtype).itemsize
    cost = pl.CostEstimate(
        flops=2 * B * D * D,
        transcendentals=0,
        bytes_accessed=w_bytes + x_bytes + o_bytes + 4 * D,
    )

    return pl.pallas_call(
        pooler_kernel,
        out_shape=jax.ShapeDtypeStruct((B, D), out_dtype),
        grid=grid,
        in_specs=[
            pl.BlockSpec((B, D), lambda n: (0, 0)),    # first-token slab (resident)
            pl.BlockSpec((D, tn), lambda n: (0, n)),   # weight [in, out] column tile
            pl.BlockSpec((1, tn), lambda n: (0, n)),   # bias tile
        ],
        out_specs=pl.BlockSpec((B, tn), lambda n: (0, n)),
        compiler_params=pltpu.CompilerParams(
            dimension_semantics=("parallel",),         # megacore splits output tiles
            vmem_limit_bytes=32 * 1024 * 1024,         # safe on v5e/v6e/v7x
        ),
        cost_estimate=cost,
    )(x2d, weight_t, bias2d)


if __name__ == "__main__":
    def run_case(key, B, S, D):
        k_x, k_w, k_b = jax.random.split(key, 3)
        hidden_states = jax.random.normal(k_x, (B, S, D), dtype=jnp.float32)

        # nn.Linear-style init: U(-1/sqrt(D), 1/sqrt(D)), torch [out, in].
        bound = 1.0 / (D ** 0.5)
        weight = jax.random.uniform(k_w, (D, D), minval=-bound, maxval=bound,
                                    dtype=jnp.float32)
        bias = jax.random.uniform(k_b, (D,), minval=-bound, maxval=bound,
                                  dtype=jnp.float32)

        # One-time prep: transpose + bf16 cast happens here, not per call.
        weight_t, bias2d = prepare_pooler_params(weight, bias)

        out = pooler_forward(hidden_states, weight_t, bias2d)
        out = jax.block_until_ready(out)

        # Reference: same bf16 rounding of the matmul inputs, f32 accumulation.
        x32 = hidden_states[:, 0].astype(jnp.bfloat16).astype(jnp.float32)
        w32 = weight_t.astype(jnp.float32)
        ref = jnp.maximum(x32 @ w32 + bias, 0.0)

        assert out.shape == (B, D)
        err = float(jnp.max(jnp.abs(out - ref)))
        assert jnp.allclose(out, ref, atol=1e-2, rtol=1e-2), err

    key = jax.random.PRNGKey(0)
    k0, k1 = jax.random.split(key)
    # GCT production config (embedding_dim=128): grid (1,), minimal-overhead path.
    run_case(k0, B=8, S=8, D=128)
    # Multi-tile path: grid (2,) — exercises the parallel output-tile split.
    run_case(k1, B=8, S=4, D=256)

    print("KERNEL_OK")
</pallas_src>

<mosaic_0001>
module attributes {stable_mosaic.version = 11 : i64} {
  func.func @pooler_kernel(%arg0: i32, %arg1: memref<8x128xf32, #tpu.memory_space<vmem>>, %arg2: memref<128x128xbf16, #tpu.memory_space<vmem>>, %arg3: memref<1x128xf32, #tpu.memory_space<vmem>>, %arg4: memref<8x128xf32, #tpu.memory_space<vmem>>) attributes {dimension_semantics = [#tpu.dimension_semantics<parallel>], iteration_bounds = array<i64: 1>, scalar_prefetch = 0 : i64, scratch_operands = 0 : i64, tpu.core_type = #tpu.core_type<tc>, window_params = [{transform_indices = @transform_0, window_bounds = array<i64: 8, 128>}, {transform_indices = @transform_1, window_bounds = array<i64: 128, 128>}, {transform_indices = @transform_2, window_bounds = array<i64: 1, 128>}, {transform_indices = @transform_3, window_bounds = array<i64: 8, 128>}]} {
    %c0 = arith.constant 0 : index
    %c0_0 = arith.constant 0 : index
    %0 = vector.load %arg1[%c0, %c0_0] : memref<8x128xf32, #tpu.memory_space<vmem>>, vector<8x128xf32>
    %1 = arith.truncf %0 : vector<8x128xf32> to vector<8x128xbf16>
    %c0_1 = arith.constant 0 : index
    %c0_2 = arith.constant 0 : index
    %2 = vector.load %arg2[%c0_1, %c0_2] : memref<128x128xbf16, #tpu.memory_space<vmem>>, vector<128x128xbf16>
    %cst = arith.constant dense<0.000000e+00> : vector<8x128xf32>
    %3 = tpu.matmul %1, %2, %cst {dimension_numbers = #tpu.dot_dimension_numbers<[1], [0], [0], [1], [0, 0, 1, 1], [], []>} : vector<8x128xbf16>, vector<128x128xbf16>, vector<8x128xf32> -> vector<8x128xf32>
    %c0_3 = arith.constant 0 : index
    %c0_4 = arith.constant 0 : index
    %4 = vector.load %arg3[%c0_3, %c0_4] : memref<1x128xf32, #tpu.memory_space<vmem>>, vector<1x128xf32>
    %5 = vector.broadcast %4 : vector<1x128xf32> to vector<8x128xf32>
    %6 = arith.addf %3, %5 : vector<8x128xf32>
    %cst_5 = arith.constant 0.000000e+00 : f32
    %7 = vector.broadcast %cst_5 : f32 to vector<8x128xf32>
    %8 = arith.maximumf %6, %7 : vector<8x128xf32>
    %c0_6 = arith.constant 0 : index
    %c0_7 = arith.constant 0 : index
    %9 = vector.load %arg4[%c0_6, %c0_7] : memref<8x128xf32, #tpu.memory_space<vmem>>, vector<8x128xf32>
    tpu.vector_store %arg4[%c0_6, %c0_7], %8 {strides = array<i32>} : memref<8x128xf32, #tpu.memory_space<vmem>>, vector<8x128xf32>,
    return
  }
  func.func @transform_0(%arg0: i32) -> (i32, i32) {
    %c0_i32 = arith.constant 0 : i32
    %c0_i32_0 = arith.constant 0 : i32
    %c0_i32_1 = arith.constant 0 : i32
    return %c0_i32, %c0_i32_0 : i32, i32
  }
  func.func @transform_1(%arg0: i32) -> (i32, i32) {
    %c0_i32 = arith.constant 0 : i32
    %c0_i32_0 = arith.constant 0 : i32
    return %c0_i32, %arg0 : i32, i32
  }
  func.func @transform_2(%arg0: i32) -> (i32, i32) {
    %c0_i32 = arith.constant 0 : i32
    %c0_i32_0 = arith.constant 0 : i32
    return %c0_i32, %arg0 : i32, i32
  }
  func.func @transform_3(%arg0: i32) -> (i32, i32) {
    %c0_i32 = arith.constant 0 : i32
    %c0_i32_0 = arith.constant 0 : i32
    return %c0_i32, %arg0 : i32, i32
  }
}

</mosaic_0001>

<llo_original>
// kernel: tpu_custom_call.1
$region0: #{tpu_custom_call.1}
  #allocation0 [shape = 'u32[]', space=smem, size = 0x4, offset = 0x4, fixed_abs, tag = 'smem constant byte address 0x4 - core index']
  #allocation1 [shape = 'u32[144,128]{1,0:T(1,128)}', space=vmem, size = 0x12000, scoped, tag = 'internal scratch']
  %s0 = inlined_call_operand.hbm [shape: f32[8,1024], index: 0, kind: input, shape index: {}]
  %s1 = inlined_call_operand.hbm [shape: bf16[128,128], index: 1, kind: input, shape index: {}]
  %s2 = inlined_call_operand.vmem [shape: f32[1,128], index: 2, kind: input, shape index: {}]
  %s3 = inlined_call_operand.hbm [shape: f32[8,128], index: 3, kind: output, shape index: {}]
  %s4 = sld [smem:[#allocation0]]
  $region30: #{tpu_custom_call.1} parent=0
    _
  %s6 = ssub.s32 1, %s4
  %s7 = scalar_select 0, %s6, %s4
  $region1: #{tpu_custom_call.1} parent=0
    #allocation2 [shape = 'u8[4096]{0}', space=vmem, size = 0x1000, scoped, tag = 'input window, operand 0, single buffered']
    #allocation3 [shape = 's32[1]{0}', space=sflag, size = 0x4, scoped, tag = 'scoped memory for tpu_custom_call.1']
    #allocation4 [shape = 's32[1]{0}', space=sflag, size = 0x4, scoped, tag = 'scoped memory for tpu_custom_call.1']
    #allocation5 [shape = 'u8[32768]{0}', space=vmem, size = 0x8000, scoped, tag = 'input window, operand 1, single buffered']
    #allocation6 [shape = 's32[1]{0}', space=sflag, size = 0x4, scoped, tag = 'scoped memory for tpu_custom_call.1']
    #allocation7 [shape = 'u8[4096]{0}', space=vmem, size = 0x1000, scoped, tag = 'output window, operand 0, single buffered']
    %8 = vsyncpa [#allocation3], 0
    %9 = vsyncpa [#allocation6], 0
    %10 = vsyncpa [#allocation4], 0
    // Predicated region
    $region2: #{tpu_custom_call.1} parent=1 // pred_check
      _
    $region3: #{tpu_custom_call.1} parent=1 // pred_check_branch
      %12 = sbr.rel (0) target = $region5
    $region4: #{tpu_custom_call.1} parent=1 // pred_region
      %s14 = ssub.s32 128, 128
      %15 = vsyncadd [#allocation3], %s14
      %s17 = sshll.u32 [#allocation2], 4
      %s18 = int_to_ptr.vmem [resolvable:$true] %s17
      %20 = dma.hbm_to_vmem [thread:$0]  %s0, 128, %s18, [#allocation3]
    $region5: #{tpu_custom_call.1} parent=1 // pred_fallthru
      _
    // Predicated region
    $region6: #{tpu_custom_call.1} parent=1 // pred_check
      _
    $region7: #{tpu_custom_call.1} parent=1 // pred_check_branch
      %22 = sbr.rel (0) target = $region9
    $region8: #{tpu_custom_call.1} parent=1 // pred_region
      %s24 = ssub.s32 1024, 1024
      %25 = vsyncadd [#allocation6], %s24
      %s26 = sshll.u32 [#allocation5], 4
      %s27 = int_to_ptr.vmem [resolvable:$true] %s26
      %32 = dma.hbm_to_vmem [thread:$0]  %s1, 1024, %s27, [#allocation6], 64, 64, 4
    $region9: #{tpu_custom_call.1} parent=1 // pred_fallthru
      _
    // Predicated region
    $region10: #{tpu_custom_call.1} parent=1 // pred_check
      _
    $region11: #{tpu_custom_call.1} parent=1 // pred_check_branch
      %34 = sbr.rel (0) target = $region13
    $region12: #{tpu_custom_call.1} parent=1 // pred_region
      _
    $region13: #{tpu_custom_call.1} parent=1 // pred_fallthru
      _
    // Predicated region
    $region14: #{tpu_custom_call.1} parent=1 // pred_check
      _
    $region15: #{tpu_custom_call.1} parent=1 // pred_check_branch
      %36 = sbr.rel (0) target = $region17
    $region16: #{tpu_custom_call.1} parent=1 // pred_region
      %37 = dma.done [#allocation3], 128
    $region17: #{tpu_custom_call.1} parent=1 // pred_fallthru
      _
    // Predicated region
    $region18: #{tpu_custom_call.1} parent=1 // pred_check
      _
    $region19: #{tpu_custom_call.1} parent=1 // pred_check_branch
      %39 = sbr.rel (0) target = $region21
    $region20: #{tpu_custom_call.1} parent=1 // pred_region
      %40 = dma.done [#allocation6], 1024
    $region21: #{tpu_custom_call.1} parent=1 // pred_fallthru
      _
    %v42 = vld [vmem:[#allocation2] sm:$0xff]
    %v43 = vpack.c.bf16 %v42, %v42
    %v44 = vld [vmem:[#allocation5] sm:$0xf]
    %v45 = vld [vmem:[#allocation5 + $0x4] sm:$0xf]
    %v46 = vld [vmem:[#allocation5 + $0x8] sm:$0xf]
    %v47 = vld [vmem:[#allocation5 + $0xc] sm:$0xf]
    %v48 = vld [vmem:[#allocation5 + $0x10] sm:$0xf]
    %v49 = vld [vmem:[#allocation5 + $0x14] sm:$0xf]
    %v50 = vld [vmem:[#allocation5 + $0x18] sm:$0xf]
    %v51 = vld [vmem:[#allocation5 + $0x1c] sm:$0xf]
    %v52 = vld [vmem:[#allocation5 + $0x20] sm:$0xf]
    %v53 = vld [vmem:[#allocation5 + $0x24] sm:$0xf]
    %v54 = vld [vmem:[#allocation5 + $0x28] sm:$0xf]
    %v55 = vld [vmem:[#allocation5 + $0x2c] sm:$0xf]
    %v56 = vld [vmem:[#allocation5 + $0x30] sm:$0xf]
    %v57 = vld [vmem:[#allocation5 + $0x34] sm:$0xf]
    %v58 = vld [vmem:[#allocation5 + $0x38] sm:$0xf]
    %v59 = vld [vmem:[#allocation5 + $0x3c] sm:$0xf]
    %v60 = vld [vmem:[%s2] sm:$0x1]
    %v62 = vlaneseq
    %v63 = vshrl.u32 %v62, 7
    %v64 = vsub.s32 0, %v63
    %v65 = vrot.slane %v60, %v64
    %v83 = vunpack.c.l.b16 %v44
    %v84 = vunpack.c.l.b16 %v45
    %v85 = vunpack.c.l.b16 %v46
    %v86 = vunpack.c.l.b16 %v47
    %v87 = vunpack.c.l.b16 %v48
    %v88 = vunpack.c.l.b16 %v49
    %v89 = vunpack.c.l.b16 %v50
    %v90 = vunpack.c.l.b16 %v51
    %v91 = vunpack.c.l.b16 %v52
    %v92 = vunpack.c.l.b16 %v53
    %v93 = vunpack.c.l.b16 %v54
    %v94 = vunpack.c.l.b16 %v55
    %v95 = vunpack.c.l.b16 %v56
    %v96 = vunpack.c.l.b16 %v57
    %v97 = vunpack.c.l.b16 %v58
    %v98 = vunpack.c.l.b16 %v59
    %v99 = vpack.c.b16 %v84, %v83
    %v100 = vpack.c.b16 %v86, %v85
    %v101 = vpack.c.b16 %v88, %v87
    %v102 = vpack.c.b16 %v90, %v89
    %v103 = vpack.c.b16 %v92, %v91
    %v104 = vpack.c.b16 %v94, %v93
    %v105 = vpack.c.b16 %v96, %v95
    %v106 = vpack.c.b16 %v98, %v97
    %115 = vmatprep.subr.bf16.mxu0 0
    %116 = vmatpush1.bf16.msra.mxu0 %v106
    %117 = vmatprep.subr.bf16.mxu0 0
    %118 = vmatpush1.bf16.msra.mxu0 %v105
    %119 = vmatprep.subr.bf16.mxu0 0
    %120 = vmatpush1.bf16.msra.mxu0 %v104
    %121 = vmatprep.subr.bf16.mxu0 0
    %122 = vmatpush1.bf16.msra.mxu0 %v103
    %123 = vmatprep.subr.bf16.mxu0 0
    %124 = vmatpush1.bf16.msra.mxu0 %v102
    %125 = vmatprep.subr.bf16.mxu0 0
    %126 = vmatpush1.bf16.msra.mxu0 %v101
    %127 = vmatprep.subr.bf16.mxu0 0
    %128 = vmatpush1.bf16.msra.mxu0 %v100
    %129 = vmatprep.subr.bf16.mxu0 0
    %130 = vmatpush1.bf16.msra.mxu0 %v99
    %131 = vmatprep.subr.bf16.mxu0 0
    %132 = vmatpush2.bf16.msra.mxu0 0
    %133 = vmatprep.subr.bf16.mxu0 0
    %134 = vmatpush2.bf16.msra.mxu0 0
    %135 = vmatprep.subr.bf16.mxu0 0
    %136 = vmatpush2.bf16.msra.mxu0 0
    %137 = vmatprep.subr.bf16.mxu0 0
    %138 = vmatpush2.bf16.msra.mxu0 0
    %139 = vmatprep.subr.bf16.mxu0 0
    %140 = vmatpush2.bf16.msra.mxu0 0
    %141 = vmatprep.subr.bf16.mxu0 0
    %142 = vmatpush2.bf16.msra.mxu0 0
    %143 = vmatprep.subr.bf16.mxu0 0
    %144 = vmatpush2.bf16.msra.mxu0 0
    %145 = vmatprep.subr.bf16.mxu0 0
    %146 = vmatpush2.bf16.msra.mxu0 0
    %147 = vmatprep.mubr.bf16.mxu0 0
    %148 = vmatmul.mubr.bf16.gmra.mxu0 %v43
    %v149 = vpop.f32.mrf.mxu0
    %v150 = vadd.f32 %v65, %v149
    %v151 = vpop.f32.mrf.mxu0
    %v152 = vpop.f32.mrf.mxu0
    %v153 = vpop.f32.mrf.mxu0
    %154 = vdwg.mxu0
    %v155 = vmax.f32 %v150, 0.0
    %156 = vst [vmem:[#allocation7] sm:$0xff] %v155
    // Predicated region
    $region22: #{tpu_custom_call.1} parent=1 // pred_check
      _
    $region23: #{tpu_custom_call.1} parent=1 // pred_check_branch
      %158 = sbr.rel (0) target = $region25
    $region24: #{tpu_custom_call.1} parent=1 // pred_region
      %s160 = ssub.s32 128, 128
      %161 = vsyncadd [#allocation4], %s160
      %s163 = sshll.u32 [#allocation7], 4
      %s164 = int_to_ptr.vmem [resolvable:$true] %s163
      %166 = dma.vmem_to_hbm [thread:$0]  %s164, 128, %s3, [#allocation4]
    $region25: #{tpu_custom_call.1} parent=1 // pred_fallthru
      _
    // Predicated region
    $region26: #{tpu_custom_call.1} parent=1 // pred_check
      _
    $region27: #{tpu_custom_call.1} parent=1 // pred_check_branch
      %168 = sbr.rel (0) target = $region29
    $region28: #{tpu_custom_call.1} parent=1 // pred_region
      %169 = dma.done [#allocation4], 128
    $region29: #{tpu_custom_call.1} parent=1 // pred_fallthru
      _
    %170 = vsyncpa [#allocation3], 1
    %171 = vsyncpa [#allocation6], 1
    %172 = vsyncpa [#allocation4], 1

</llo_original>
